<compile_context>
chip_gen: v7x
topology: tpu7x:2x2x1
jax: 0.10.0
libtpu: 0.0.40
codegen_flags: <defaults>
</compile_context>

<pallas_src>
import math

import jax
import jax.numpy as jnp
from jax.experimental import pallas as pl
from jax.experimental.pallas import tpu as pltpu


def _locked_dropout_kernel(mask_ref, x_ref, o_ref):
    # mask_ref block: (tB, 1, tH)   -- same block reused across all S tiles
    # x_ref / o_ref : (tB, tS, tH)
    o_ref[...] = x_ref[...] * mask_ref[...]        # broadcast over the S tile


def _choose_tiles(B, S, H, itemsize, budget_bytes):
    """Pick (tB, tS, tH) so one x block is <= ~budget_bytes.

    TPU block rules: second-to-last block dim must be a multiple of the
    sublane pack (8 for f32, 16 for bf16, ...) or equal S; last block dim must
    be a multiple of 128 or equal H.
    """
    max_elems = max(1, budget_bytes // itemsize)
    sub = 8 * max(1, 4 // itemsize)           # sublane packing per dtype

    # Hidden tile: only split H when a single row already exceeds the budget
    # and H can legally be tiled (multiple of 128).
    if H * itemsize <= budget_bytes or H % 128 != 0:
        tH = H
    else:
        tH = max(128, min(H, (max_elems // sub) // 128 * 128))

    rows = max(1, max_elems // tH)            # rows of length tH per block
    if S <= rows:
        tS = S                                # full seq dim (always legal)
        tB = int(min(B, max(1, rows // max(1, S))))
    else:
        tS = int(min(S, max(sub, rows // sub * sub)))
        tB = 1
    return tB, tS, tH


def locked_dropout(x, seed, dropout=0.5, training=True, *,
                   block_budget_bytes=4 << 20, donate_x=False):
    """JAX/Pallas equivalent of LockedDropout.forward(x, dropout, batch_first=True)."""
    if (not training) or (not dropout):
        return x
    if dropout >= 1.0:
        # TODO(synk): PyTorch's mask.div_(1 - dropout) would produce inf/NaN
        # here; we return zeros (everything dropped) instead.
        return jnp.zeros_like(x)

    B, S, H = x.shape
    scale = 1.0 / (1.0 - float(dropout))

    # Per-(batch, hidden) Bernoulli(1-p) mask, locked across S; sampled once in
    # the wrapper (PRNG hoisted out of the kernel), pre-scaled and pre-cast so
    # the kernel is a single native-dtype multiply.
    keep = jax.random.bernoulli(
        jax.random.PRNGKey(seed), 1.0 - float(dropout), (B, 1, H))
    mask = (keep.astype(jnp.float32) * jnp.float32(scale)).astype(x.dtype)

    # Lane-dense folding: make the last dim a multiple of 128 so output stores
    # are unmasked full-lane vst.  Contiguous reshape => free layout change.
    k = 128 // math.gcd(H, 128)
    if k > 1 and S % k == 0:
        x_in = x.reshape(B, S // k, k * H)
        mask_in = jnp.tile(mask, (1, 1, k))
    else:
        # TODO(synk): H % 128 != 0 and S % k != 0 -> masked partial stores;
        # padding S would cost an extra full HBM round-trip, so we accept it.
        x_in, mask_in = x, mask
    Bf, Sf, Hf = x_in.shape

    itemsize = jnp.dtype(x.dtype).itemsize
    tB, tS, tH = _choose_tiles(Bf, Sf, Hf, itemsize, block_budget_bytes)
    grid = (pl.cdiv(Bf, tB), pl.cdiv(Sf, tS), pl.cdiv(Hf, tH))

    # x and out are double-buffered by the pipeline; the mask block is tiny.
    # An explicit limit keeps the 4 MiB budget safe on v5e's 16 MiB default
    # scoped VMEM; in the normal case this is ~22 MiB, well under every chip's
    # physical VMEM (v7x: 64 MiB).
    x_block_bytes = tB * tS * tH * itemsize
    m_block_bytes = tB * 1 * tH * itemsize
    vmem_limit = max(16 << 20,
                     2 * 2 * x_block_bytes + 2 * m_block_bytes + (6 << 20))

    cost = pl.CostEstimate(
        flops=B * S * H,
        transcendentals=0,
        bytes_accessed=2 * B * S * H * itemsize + B * H * itemsize,
    )

    out = pl.pallas_call(
        _locked_dropout_kernel,
        out_shape=jax.ShapeDtypeStruct((Bf, Sf, Hf), x.dtype),
        grid_spec=pl.GridSpec(
            grid=grid,
            in_specs=[
                pl.BlockSpec((tB, 1, tH), lambda b, s, h: (b, 0, h)),    # mask
                pl.BlockSpec((tB, tS, tH), lambda b, s, h: (b, s, h)),   # x
            ],
            out_specs=pl.BlockSpec((tB, tS, tH), lambda b, s, h: (b, s, h)),
        ),
        compiler_params=pltpu.CompilerParams(
            dimension_semantics=("parallel", "parallel", "parallel"),
            vmem_limit_bytes=int(vmem_limit)),
        cost_estimate=cost,
        input_output_aliases=({1: 0} if donate_x else {}),
    )(mask_in, x_in)

    return out.reshape(B, S, H)


if __name__ == "__main__":
    key = jax.random.PRNGKey(0)

    def reference(x, seed, p):
        keep = jax.random.bernoulli(
            jax.random.PRNGKey(seed), 1.0 - p, (x.shape[0], 1, x.shape[2]))
        return x * jnp.where(keep, 1.0 / (1.0 - p), 0.0).astype(x.dtype), keep

    # 1) Shapes implied by the module (B, S, H) = (2, 8, 32); H folds 32 -> 128 lanes.
    B, S, H = 2, 8, 32
    x = jax.random.normal(key, (B, S, H), dtype=jnp.float32)
    seed, p = 1234, 0.5
    y = jax.block_until_ready(locked_dropout(x, seed=seed, dropout=p, training=True))
    exp, keep = reference(x, seed, p)
    assert y.shape == x.shape and y.dtype == x.dtype
    assert bool(jnp.allclose(y, exp, rtol=1e-6, atol=1e-6))
    # Mask is "locked": every dropped hidden unit is zero at every sequence step.
    assert bool(jnp.all(jnp.where(~keep, y == 0.0, True)))

    # 2) Ragged sequence tiles + multi-block grid (tiny budget forces tiling).
    x2 = jax.random.normal(jax.random.PRNGKey(1), (3, 20, 128), dtype=jnp.float32)
    y2 = jax.block_until_ready(
        locked_dropout(x2, seed=7, dropout=0.25, block_budget_bytes=16 * 128 * 4))
    exp2, _ = reference(x2, 7, 0.25)
    assert bool(jnp.allclose(y2, exp2, rtol=1e-6, atol=1e-6))

    # 3) Unfoldable path (H % 128 != 0 and S % k != 0) stays correct.
    x3 = jax.random.normal(jax.random.PRNGKey(2), (2, 10, 48), dtype=jnp.float32)
    y3 = jax.block_until_ready(locked_dropout(x3, seed=3, dropout=0.5))
    exp3, _ = reference(x3, 3, 0.5)
    assert bool(jnp.allclose(y3, exp3, rtol=1e-6, atol=1e-6))

    # 4) Eval / no-dropout path returns the input unchanged.
    y_eval = jax.block_until_ready(locked_dropout(x, seed=seed, dropout=p, training=False))
    assert bool(jnp.all(y_eval == x))

    # 5) Native bf16 path (no f32 upcast) with in-place (aliased) output.
    x4 = jax.random.normal(jax.random.PRNGKey(3), (B, S, H), dtype=jnp.bfloat16)
    exp4, _ = reference(x4.astype(jnp.float32), 9, 0.25)
    y4 = jax.block_until_ready(locked_dropout(x4, seed=9, dropout=0.25, donate_x=True))
    assert y4.shape == x4.shape and y4.dtype == jnp.bfloat16
    assert bool(jnp.allclose(y4.astype(jnp.float32), exp4, rtol=2e-2, atol=1e-2))

    print("KERNEL_OK")
</pallas_src>

<mosaic_0001>
module attributes {stable_mosaic.version = 11 : i64} {
  func.func @_locked_dropout_kernel(%arg0: i32, %arg1: i32, %arg2: i32, %arg3: memref<2x1x128xf32, #tpu.memory_space<vmem>>, %arg4: memref<2x2x128xf32, #tpu.memory_space<vmem>>, %arg5: memref<2x2x128xf32, #tpu.memory_space<vmem>>) attributes {dimension_semantics = [#tpu.dimension_semantics<parallel>, #tpu.dimension_semantics<parallel>, #tpu.dimension_semantics<parallel>], iteration_bounds = array<i64: 1, 1, 1>, scalar_prefetch = 0 : i64, scratch_operands = 0 : i64, tpu.core_type = #tpu.core_type<tc>, window_params = [{transform_indices = @transform_0, window_bounds = array<i64: 2, 1, 128>}, {transform_indices = @transform_1, window_bounds = array<i64: 2, 2, 128>}, {transform_indices = @transform_2, window_bounds = array<i64: 2, 2, 128>}]} {
    %c0 = arith.constant 0 : index
    %c0_0 = arith.constant 0 : index
    %c0_1 = arith.constant 0 : index
    %0 = vector.load %arg4[%c0, %c0_0, %c0_1] : memref<2x2x128xf32, #tpu.memory_space<vmem>>, vector<2x2x128xf32>
    %c0_2 = arith.constant 0 : index
    %c0_3 = arith.constant 0 : index
    %c0_4 = arith.constant 0 : index
    %1 = vector.load %arg3[%c0_2, %c0_3, %c0_4] : memref<2x1x128xf32, #tpu.memory_space<vmem>>, vector<2x1x128xf32>
    %2 = vector.broadcast %1 : vector<2x1x128xf32> to vector<2x2x128xf32>
    %3 = arith.mulf %0, %2 : vector<2x2x128xf32>
    %c0_5 = arith.constant 0 : index
    %c0_6 = arith.constant 0 : index
    %c0_7 = arith.constant 0 : index
    %4 = vector.load %arg5[%c0_5, %c0_6, %c0_7] : memref<2x2x128xf32, #tpu.memory_space<vmem>>, vector<2x2x128xf32>
    tpu.vector_store %arg5[%c0_5, %c0_6, %c0_7], %3 {strides = array<i32>} : memref<2x2x128xf32, #tpu.memory_space<vmem>>, vector<2x2x128xf32>,
    return
  }
  func.func @transform_0(%arg0: i32, %arg1: i32, %arg2: i32) -> (i32, i32, i32) {
    %c0_i32 = arith.constant 0 : i32
    %c0_i32_0 = arith.constant 0 : i32
    return %arg0, %c0_i32, %arg2 : i32, i32, i32
  }
  func.func @transform_1(%arg0: i32, %arg1: i32, %arg2: i32) -> (i32, i32, i32) {
    %c0_i32 = arith.constant 0 : i32
    return %arg0, %arg1, %arg2 : i32, i32, i32
  }
  func.func @transform_2(%arg0: i32, %arg1: i32, %arg2: i32) -> (i32, i32, i32) {
    %c0_i32 = arith.constant 0 : i32
    return %arg0, %arg1, %arg2 : i32, i32, i32
  }
}

</mosaic_0001>

<llo_original>
// kernel: tpu_custom_call.1
$region0: #{tpu_custom_call.1}
  #allocation0 [shape = 'u32[]', space=smem, size = 0x4, offset = 0x4, fixed_abs, tag = 'smem constant byte address 0x4 - core index']
  #allocation1 [shape = 'u32[144,128]{1,0:T(1,128)}', space=vmem, size = 0x12000, scoped, tag = 'internal scratch']
  %s0 = inlined_call_operand.hbm [shape: f32[2,1,128], index: 0, kind: input, shape index: {}]
  %s1 = inlined_call_operand.hbm [shape: f32[2,2,128], index: 1, kind: input, shape index: {}]
  %s2 = inlined_call_operand.hbm [shape: f32[2,2,128], index: 2, kind: output, shape index: {}]
  %s3 = sld [smem:[#allocation0]]
  $region26: #{tpu_custom_call.1} parent=0
    _
  %s5 = ssub.s32 1, %s3
  %s6 = scalar_select 0, %s5, %s3
  $region1: #{tpu_custom_call.1} parent=0
    #allocation2 [shape = 'u8[1024]{0}', space=vmem, size = 0x400, scoped, tag = 'input window, operand 0, single buffered']
    #allocation3 [shape = 's32[1]{0}', space=sflag, size = 0x4, scoped, tag = 'scoped memory for tpu_custom_call.1']
    #allocation4 [shape = 's32[1]{0}', space=sflag, size = 0x4, scoped, tag = 'scoped memory for tpu_custom_call.1']
    #allocation5 [shape = 'u8[2048]{0}', space=vmem, size = 0x800, scoped, tag = 'input window, operand 1, single buffered']
    #allocation6 [shape = 's32[1]{0}', space=sflag, size = 0x4, scoped, tag = 'scoped memory for tpu_custom_call.1']
    #allocation7 [shape = 'u8[2048]{0}', space=vmem, size = 0x800, scoped, tag = 'output window, operand 0, single buffered']
    %7 = vsyncpa [#allocation3], 0
    %8 = vsyncpa [#allocation6], 0
    %9 = vsyncpa [#allocation4], 0
    // Predicated region
    $region2: #{tpu_custom_call.1} parent=1 // pred_check
      _
    $region3: #{tpu_custom_call.1} parent=1 // pred_check_branch
      %11 = sbr.rel (0) target = $region5
    $region4: #{tpu_custom_call.1} parent=1 // pred_region
      %s13 = ssub.s32 32, 32
      %14 = vsyncadd [#allocation3], %s13
      %s15 = sshll.u32 [#allocation2], 4
      %s16 = int_to_ptr.vmem [resolvable:$true] %s15
      %21 = dma.hbm_to_vmem [thread:$0]  %s0, 32, %s16, [#allocation3], 16, 16, 1
    $region5: #{tpu_custom_call.1} parent=1 // pred_fallthru
      _
    // Predicated region
    $region6: #{tpu_custom_call.1} parent=1 // pred_check
      _
    $region7: #{tpu_custom_call.1} parent=1 // pred_check_branch
      %23 = sbr.rel (0) target = $region9
    $region8: #{tpu_custom_call.1} parent=1 // pred_region
      %s25 = ssub.s32 64, 64
      %26 = vsyncadd [#allocation6], %s25
      %s27 = sshll.u32 [#allocation5], 4
      %s28 = int_to_ptr.vmem [resolvable:$true] %s27
      %33 = dma.hbm_to_vmem [thread:$0]  %s1, 64, %s28, [#allocation6], 32, 32, 2
    $region9: #{tpu_custom_call.1} parent=1 // pred_fallthru
      _
    // Predicated region
    $region10: #{tpu_custom_call.1} parent=1 // pred_check
      _
    $region11: #{tpu_custom_call.1} parent=1 // pred_check_branch
      %35 = sbr.rel (0) target = $region13
    $region12: #{tpu_custom_call.1} parent=1 // pred_region
      %36 = dma.done [#allocation3], 32
    $region13: #{tpu_custom_call.1} parent=1 // pred_fallthru
      _
    // Predicated region
    $region14: #{tpu_custom_call.1} parent=1 // pred_check
      _
    $region15: #{tpu_custom_call.1} parent=1 // pred_check_branch
      %38 = sbr.rel (0) target = $region17
    $region16: #{tpu_custom_call.1} parent=1 // pred_region
      %39 = dma.done [#allocation6], 64
    $region17: #{tpu_custom_call.1} parent=1 // pred_fallthru
      _
    %v40 = vld [vmem:[#allocation5] sm:$0x3]
    %v41 = vld [vmem:[#allocation5 + $0x2] sm:$0x3]
    %v42 = vld [vmem:[#allocation2] sm:$0x1]
    %v43 = vld [vmem:[#allocation2 + $0x1] sm:$0x1]
    %v46 = vlaneseq
    %v47 = vshrl.u32 %v46, 7
    %v48 = vsub.s32 0, %v47
    %v49 = vrot.slane %v42, %v48
    %v50 = vlaneseq
    %v51 = vshrl.u32 %v50, 7
    %v52 = vsub.s32 0, %v51
    %v53 = vrot.slane %v43, %v52
    %v56 = vmul.f32 %v40, %v49
    %v57 = vmul.f32 %v41, %v53
    %58 = vst [vmem:[#allocation7] sm:$0x3] %v56
    %59 = vst [vmem:[#allocation7 + $0x2] sm:$0x3] %v57
    // Predicated region
    $region18: #{tpu_custom_call.1} parent=1 // pred_check
      _
    $region19: #{tpu_custom_call.1} parent=1 // pred_check_branch
      %61 = sbr.rel (0) target = $region21
    $region20: #{tpu_custom_call.1} parent=1 // pred_region
      %s63 = ssub.s32 64, 64
      %64 = vsyncadd [#allocation4], %s63
      %s65 = sshll.u32 [#allocation7], 4
      %s66 = int_to_ptr.vmem [resolvable:$true] %s65
      %71 = dma.vmem_to_hbm [thread:$0]  %s66, 64, %s2, [#allocation4], 32, 32, 2
    $region21: #{tpu_custom_call.1} parent=1 // pred_fallthru
      _
    // Predicated region
    $region22: #{tpu_custom_call.1} parent=1 // pred_check
      _
    $region23: #{tpu_custom_call.1} parent=1 // pred_check_branch
      %73 = sbr.rel (0) target = $region25
    $region24: #{tpu_custom_call.1} parent=1 // pred_region
      %74 = dma.done [#allocation4], 64
    $region25: #{tpu_custom_call.1} parent=1 // pred_fallthru
      _
    %75 = vsyncpa [#allocation3], 1
    %76 = vsyncpa [#allocation6], 1
    %77 = vsyncpa [#allocation4], 1

</llo_original>
